<compile_context>
chip_gen: v7x
topology: tpu7x:2x2x1
jax: 0.10.0
libtpu: 0.0.40
codegen_flags: <defaults>
</compile_context>

<pallas_src>
import functools

import jax
import jax.numpy as jnp
from jax.experimental import pallas as pl
from jax.experimental.pallas import tpu as pltpu


def _reweighter_kernel(inv_t_ref, w_ref, x_ref, o_ref):
    """Generic path: x_ref (TB, N); softmax over the full last (lane) axis."""
    inv_t = inv_t_ref[0, 0]
    x = x_ref[...].astype(jnp.float32)
    w = w_ref[...].astype(jnp.float32) * inv_t      # scale the (1, N) row only
    z = x * w
    m = jnp.max(z, axis=-1, keepdims=True)
    e = jnp.exp(z - m)
    s = jnp.sum(e, axis=-1, keepdims=True)
    o_ref[...] = (e / s).astype(o_ref.dtype)        # exact divide: rows sum to 1


def _reweighter_packed_kernel(inv_t_ref, w_ref, x_ref, o_ref, *, groups, n):
    """Lane-dense path: (B, N) packed to (B*N//128, 128); each 128-lane row
    carries `groups` independent softmax rows of length `n`."""
    inv_t = inv_t_ref[0, 0]
    x = x_ref[...].astype(jnp.float32)              # (TR, 128)
    w = w_ref[...].astype(jnp.float32) * inv_t      # (1, 128) tiled weight row
    z = x * w
    tr = z.shape[0]
    z3 = z.reshape(tr, groups, n)                   # segmented view per softmax row
    m = jnp.max(z3, axis=-1, keepdims=True)
    e = jnp.exp(z3 - m)
    s = jnp.sum(e, axis=-1, keepdims=True)
    y = (e / s).reshape(tr, groups * n)
    o_ref[...] = y.astype(o_ref.dtype)


def _choose_batch_tile(rows, lane_width_padded, itemsize, sublane_mult,
                       target_bytes=1 << 20):
    """Largest sublane-aligned row tile whose lane-PADDED data block fits
    ~target_bytes (~1 MiB reaches ~85% of HBM roofline with far less VMEM
    pressure than 4 MiB blocks)."""
    row_bytes = lane_width_padded * itemsize
    tb = (target_bytes // max(1, row_bytes)) // sublane_mult * sublane_mult
    tb = max(sublane_mult, tb)
    if rows >= 2 * sublane_mult:
        # Ensure >= 2 grid tiles so the "parallel" axis can use both v7x TCs.
        half = ((rows + 1) // 2) // sublane_mult * sublane_mult
        tb = max(sublane_mult, min(tb, half))
    if tb >= rows:
        return rows
    return tb


def _vmem_budget(tb, lane_width_padded, in_itemsize, out_itemsize):
    """VMEM limit from the real (lane-padded) block footprint: 2x double-buffered
    in + out blocks plus ~4 f32 tile-sized compiler temporaries plus slack."""
    blk_in = tb * lane_width_padded * in_itemsize
    blk_out = tb * lane_width_padded * out_itemsize
    temps = 4 * tb * lane_width_padded * 4
    total = 2 * (blk_in + blk_out) + temps + (4 << 20)
    # Clamp: never below v5e's 16 MiB scoped default, never near v7x's 64 MiB.
    return int(min(max(total, 16 << 20), 56 << 20))


def reweighter_forward(x, weights, temperature):
    """x: (B, N), weights: (N,) -> softmax(weights * x / temperature, axis=-1)."""
    B, N = x.shape
    inv_t = (jnp.float32(1.0) / jnp.asarray(temperature, jnp.float32)).reshape(1, 1)

    itemsize = jnp.dtype(x.dtype).itemsize
    sublane_mult = {1: 32, 2: 16, 4: 8}.get(itemsize, 8)

    lane_pack = (N < 128) and (128 % N == 0) and ((B * N) % 128 == 0)
    if lane_pack:
        groups = 128 // N
        rows, lanes = (B * N) // 128, 128
        x_in = x.reshape(rows, lanes)                       # free, row-major
        w_in = jnp.tile(weights.reshape(1, N), (1, groups))  # (1, 128)
        kernel = functools.partial(_reweighter_packed_kernel, groups=groups, n=N)
    else:
        rows, lanes = B, N
        x_in = x
        w_in = weights.reshape(1, N)
        kernel = _reweighter_kernel

    lanes_padded = max(((lanes + 127) // 128) * 128, 128)
    tb = _choose_batch_tile(rows, lanes_padded, itemsize, sublane_mult)
    n_tiles = pl.cdiv(rows, tb)

    out = pl.pallas_call(
        kernel,
        out_shape=jax.ShapeDtypeStruct((rows, lanes), x.dtype),
        grid_spec=pl.GridSpec(
            grid=(n_tiles,),
            in_specs=[
                # 1/temperature scalar lives in SMEM (trace-safe).
                pl.BlockSpec(memory_space=pltpu.MemorySpace.SMEM),
                # (1, lanes) weight row: constant index_map -> stays resident.
                pl.BlockSpec((1, lanes), lambda i: (0, 0)),
                # Batch-tiled x stream.
                pl.BlockSpec((tb, lanes), lambda i: (i, 0)),
            ],
            out_specs=pl.BlockSpec((tb, lanes), lambda i: (i, 0)),
        ),
        compiler_params=pltpu.CompilerParams(
            dimension_semantics=("parallel",),   # v7x: shard tiles over 2 TCs
            vmem_limit_bytes=_vmem_budget(tb, lanes_padded, itemsize, itemsize),
        ),
    )(inv_t, w_in, x_in)

    if lane_pack:
        out = out.reshape(B, N)
    return out


def _reference(x, weights, temperature):
    z = weights[None, :] * x / temperature
    return jax.nn.softmax(z, axis=-1)


def _check(B, N, temperature, key):
    kx, kw = jax.random.split(key)
    x = jax.random.normal(kx, (B, N), dtype=jnp.float32)
    # Deterministic init mirroring torch: uniform(0,1) then normalize to sum=1.
    w_raw = jax.random.uniform(kw, (N,), dtype=jnp.float32)
    weights = w_raw / jnp.sum(w_raw)

    y = jax.block_until_ready(reweighter_forward(x, weights, temperature))
    y_ref = _reference(x, weights, temperature)

    assert y.shape == (B, N)
    assert jnp.allclose(y, y_ref, atol=1e-5, rtol=1e-5), "mismatch vs reference"
    assert jnp.allclose(jnp.sum(y, axis=-1), jnp.ones((B,)), atol=1e-5)


if __name__ == "__main__":
    key = jax.random.PRNGKey(0)
    k1, k2 = jax.random.split(key)

    # Module's actual shape: batch=8 rows, n_inputs=32 -> lane-dense packed path.
    _check(B=8, N=32, temperature=2.0, key=k1)

    # Also exercise the generic (lane-wide, batch-tiled) path.
    _check(B=16, N=256, temperature=0.5, key=k2)

    print("KERNEL_OK")
</pallas_src>

<mosaic_0001>
module attributes {stable_mosaic.version = 11 : i64} {
  func.func @_reweighter_packed_kernel(%arg0: i32, %arg1: memref<1x1xf32, #tpu.memory_space<smem>>, %arg2: memref<1x128xf32, #tpu.memory_space<vmem>>, %arg3: memref<2x128xf32, #tpu.memory_space<vmem>>, %arg4: memref<2x128xf32, #tpu.memory_space<vmem>>) attributes {dimension_semantics = [#tpu.dimension_semantics<parallel>], iteration_bounds = array<i64: 1>, scalar_prefetch = 0 : i64, scratch_operands = 0 : i64, tpu.core_type = #tpu.core_type<tc>, window_params = [{transform_indices = @transform_0, window_bounds = array<i64: 1, 1>}, {pipeline_mode = #tpu.pipeline_mode<synchronous>, transform_indices = @transform_1, window_bounds = array<i64: 1, 128>}, {transform_indices = @transform_2, window_bounds = array<i64: 2, 128>}, {transform_indices = @transform_3, window_bounds = array<i64: 2, 128>}]} {
    %c0 = arith.constant 0 : index
    %c0_0 = arith.constant 0 : index
    %0 = memref.load %arg1[%c0, %c0_0] : memref<1x1xf32, #tpu.memory_space<smem>>
    %c0_1 = arith.constant 0 : index
    %c0_2 = arith.constant 0 : index
    %1 = vector.load %arg3[%c0_1, %c0_2] : memref<2x128xf32, #tpu.memory_space<vmem>>, vector<2x128xf32>
    %c0_3 = arith.constant 0 : index
    %c0_4 = arith.constant 0 : index
    %2 = vector.load %arg2[%c0_3, %c0_4] : memref<1x128xf32, #tpu.memory_space<vmem>>, vector<1x128xf32>
    %3 = vector.broadcast %0 : f32 to vector<1x128xf32>
    %4 = arith.mulf %2, %3 : vector<1x128xf32>
    %5 = vector.broadcast %4 : vector<1x128xf32> to vector<2x128xf32>
    %6 = arith.mulf %1, %5 : vector<2x128xf32>
    %7 = vector.shape_cast %6 : vector<2x128xf32> to vector<2x4x32xf32>
    %cst = arith.constant dense<0xFF800000> : vector<2x4xf32>
    %8 = vector.multi_reduction <maximumf>, %7, %cst [2] : vector<2x4x32xf32> to vector<2x4xf32>
    %9 = vector.shape_cast %8 : vector<2x4xf32> to vector<2x4x1xf32>
    %10 = vector.broadcast %9 : vector<2x4x1xf32> to vector<2x4x32xf32>
    %11 = arith.subf %7, %10 : vector<2x4x32xf32>
    %12 = math.exp %11 : vector<2x4x32xf32>
    %cst_5 = arith.constant dense<0.000000e+00> : vector<2x4xf32>
    %13 = vector.multi_reduction <add>, %12, %cst_5 [2] : vector<2x4x32xf32> to vector<2x4xf32>
    %14 = vector.shape_cast %13 : vector<2x4xf32> to vector<2x4x1xf32>
    %15 = vector.broadcast %14 : vector<2x4x1xf32> to vector<2x4x32xf32>
    %16 = arith.divf %12, %15 : vector<2x4x32xf32>
    %17 = vector.shape_cast %16 : vector<2x4x32xf32> to vector<2x128xf32>
    %c0_6 = arith.constant 0 : index
    %c0_7 = arith.constant 0 : index
    %18 = vector.load %arg4[%c0_6, %c0_7] : memref<2x128xf32, #tpu.memory_space<vmem>>, vector<2x128xf32>
    tpu.vector_store %arg4[%c0_6, %c0_7], %17 {strides = array<i32>} : memref<2x128xf32, #tpu.memory_space<vmem>>, vector<2x128xf32>,
    return
  }
  func.func @transform_0(%arg0: i32) -> (i32, i32) {
    %c0_i32 = arith.constant 0 : i32
    %c0_i32_0 = arith.constant 0 : i32
    %c0_i32_1 = arith.constant 0 : i32
    return %c0_i32, %c0_i32_0 : i32, i32
  }
  func.func @transform_1(%arg0: i32) -> (i32, i32) {
    %c0_i32 = arith.constant 0 : i32
    %c0_i32_0 = arith.constant 0 : i32
    %c0_i32_1 = arith.constant 0 : i32
    return %c0_i32, %c0_i32_0 : i32, i32
  }
  func.func @transform_2(%arg0: i32) -> (i32, i32) {
    %c0_i32 = arith.constant 0 : i32
    %c0_i32_0 = arith.constant 0 : i32
    return %arg0, %c0_i32 : i32, i32
  }
  func.func @transform_3(%arg0: i32) -> (i32, i32) {
    %c0_i32 = arith.constant 0 : i32
    %c0_i32_0 = arith.constant 0 : i32
    return %arg0, %c0_i32 : i32, i32
  }
}

</mosaic_0001>

<llo_original>
// kernel: tpu_custom_call.1
$region0: #{tpu_custom_call.1}
  #allocation0 [shape = 'u32[]', space=smem, size = 0x4, offset = 0x4, fixed_abs, tag = 'smem constant byte address 0x4 - core index']
  #allocation1 [shape = 'u32[144,128]{1,0:T(1,128)}', space=vmem, size = 0x12000, scoped, tag = 'internal scratch']
  #allocation2 [shape = 'f32[1,1]{1,0:T(1,128)S(6)}', space=smem, size = 0x200, scoped, tag = 'scoped memory for tpu_custom_call.1']
  %s0 = inlined_call_operand.<no memory space> [shape: f32[1,1], index: 0, kind: input, shape index: {}]
  %s1 = inlined_call_operand.vmem [shape: f32[1,128], index: 1, kind: input, shape index: {}]
  %s2 = inlined_call_operand.vmem [shape: f32[2,128], index: 2, kind: input, shape index: {}]
  %s3 = inlined_call_operand.hbm [shape: f32[2,128], index: 3, kind: output, shape index: {}]
  %s4 = sld [smem:[#allocation0]]
  $region22: #{tpu_custom_call.1} parent=0
    _
  %s6 = ssub.s32 1, %s4
  %s7 = scalar_select 0, %s6, %s4
  %8 = sst [smem:[#allocation2]] %s0
  $region1: #{tpu_custom_call.1} parent=0
    #allocation3 [shape = 'u8[1024]{0}', space=vmem, size = 0x400, scoped, tag = 'output window, operand 0, single buffered']
    #allocation4 [shape = 's32[1]{0}', space=sflag, size = 0x4, scoped, tag = 'scoped memory for tpu_custom_call.1']
    %9 = vsyncpa [#allocation4], 0
    // Predicated region
    $region2: #{tpu_custom_call.1} parent=1 // pred_check
      _
    $region3: #{tpu_custom_call.1} parent=1 // pred_check_branch
      %11 = sbr.rel (0) target = $region5
    $region4: #{tpu_custom_call.1} parent=1 // pred_region
      _
    $region5: #{tpu_custom_call.1} parent=1 // pred_fallthru
      _
    // Predicated region
    $region6: #{tpu_custom_call.1} parent=1 // pred_check
      _
    $region7: #{tpu_custom_call.1} parent=1 // pred_check_branch
      %13 = sbr.rel (0) target = $region9
    $region8: #{tpu_custom_call.1} parent=1 // pred_region
      _
    $region9: #{tpu_custom_call.1} parent=1 // pred_fallthru
      _
    // Predicated region
    $region10: #{tpu_custom_call.1} parent=1 // pred_check
      _
    $region11: #{tpu_custom_call.1} parent=1 // pred_check_branch
      %15 = sbr.rel (0) target = $region13
    $region12: #{tpu_custom_call.1} parent=1 // pred_region
      _
    $region13: #{tpu_custom_call.1} parent=1 // pred_fallthru
      _
    %s16 = sld [smem:[#allocation2]]
    %v17 = vld [vmem:[%s2] sm:$0x3]
    %v18 = vld [vmem:[%s1] sm:$0x1]
    %v19 = vstv %s16
    %v20 = vmul.f32 %v18, %v19
    %v22 = vlaneseq
    %v23 = vshrl.u32 %v22, 7
    %v24 = vsub.s32 0, %v23
    %v25 = vrot.slane %v20, %v24
    %v27 = vmul.f32 %v17, %v25
    %29 = vrot.lane.b32.xlu0 %v27, 96
    %v30 = vpop.permute.xlu0 %29
    %32 = vrot.lane.b32.xlu0 %v27, 64
    %v33 = vpop.permute.xlu0 %32
    %35 = vrot.lane.b32.xlu0 %v27, 32
    %v36 = vpop.permute.xlu0 %35
    %v38 = vcombine.low %v27, %v33
    %v40 = vunpack.c.l.s4 1983009808
    %v41 = vunpack.c.0.s8 %v40
    %v42 = vlaneseq
    %v43 = vshrl.u32 %v42, 7
    %v44 = vsub.s32 %v41, %v43
    %v45 = vrot.slane %v38, %v44
    %v46 = vcombine.low %v30, %v36
    %v48 = vunpack.c.l.s4 1983009808
    %v49 = vunpack.c.0.s8 %v48
    %v50 = vlaneseq
    %v51 = vshrl.u32 %v50, 7
    %v52 = vsub.s32 %v49, %v51
    %v53 = vrot.slane %v46, %v52
    %v54 = vcombine.low %v45, %v53
    %v56 = vunpack.c.l.s4 1934713408
    %v57 = vunpack.c.0.s8 %v56
    %v58 = vlaneseq
    %v59 = vshrl.u32 %v58, 7
    %v60 = vsub.s32 %v57, %v59
    %v61 = vrot.slane %v54, %v60
    %v62 = vcombine.high %v61, 0.0
    %vm63 = vcmask 257024
    %v64 = vsel %vm63, %v61, -inf
    %65 = vmax.xlane.f32.xlu0 %v64
    %v66 = vpop.xlane.xlu0 %65
    %v67 = vsel %vm63, %v62, -inf
    %68 = vmax.xlane.f32.xlu0 %v67
    %v69 = vpop.xlane.xlu0 %68
    %v70 = vsub.f32 %v61, %v66
    %v71 = vsub.f32 %v62, %v69
    %v72 = vmul.f32 %v70, 1.442695
    %v73 = vpow.pop %v72
    %v74 = vmul.f32 %v71, 1.442695
    %v75 = vpow.pop %v74
    %v76 = vsel %vm63, %v73, 0.0
    %77 = vadd.xlane.f32.xlu0 %v76
    %v78 = vpop.xlane.xlu0 %77
    %v79 = vsel %vm63, %v75, 0.0
    %80 = vadd.xlane.f32.xlu0 %v79
    %v81 = vpop.xlane.xlu0 %80
    %v82 = vrcp.pop %v78
    %v83 = vmul.f32 %v73, %v82
    %v85 = vunpack.c.l.s4 1983009808
    %v86 = vunpack.c.0.s8 %v85
    %v87 = vlaneseq
    %v88 = vshrl.u32 %v87, 7
    %v89 = vsub.s32 %v86, %v88
    %v90 = vrot.slane %v83, %v89
    %v91 = vrcp.pop %v81
    %v92 = vmul.f32 %v75, %v91
    %v94 = vunpack.c.l.s4 1983009808
    %v95 = vunpack.c.0.s8 %v94
    %v96 = vlaneseq
    %v97 = vshrl.u32 %v96, 7
    %v98 = vsub.s32 %v95, %v97
    %v99 = vrot.slane %v92, %v98
    %v100 = vcombine.low %v90, %v99
    %v101 = vcombine.high %v90, %v99
    %v103 = vunpack.c.l.s4 1934713408
    %v104 = vunpack.c.0.s8 %v103
    %v105 = vlaneseq
    %v106 = vshrl.u32 %v105, 7
    %v107 = vsub.s32 %v104, %v106
    %v108 = vrot.slane %v100, %v107
    %v110 = vunpack.c.l.s4 1934713408
    %v111 = vunpack.c.0.s8 %v110
    %v112 = vlaneseq
    %v113 = vshrl.u32 %v112, 7
    %v114 = vsub.s32 %v111, %v113
    %v115 = vrot.slane %v101, %v114
    %v116 = vcombine.high %v108, 0.0
    %v117 = vcombine.high %v115, 0.0
    %119 = vrot.lane.b32.xlu0 %v116, 32
    %v120 = vpop.permute.xlu0 %119
    %123 = vrot.lane.b32.xlu0 %v115, 64
    %v124 = vpop.permute.xlu0 %123
    %127 = vrot.lane.b32.xlu0 %v117, 96
    %v128 = vpop.permute.xlu0 %127
    %vm130 = vcmask 261120
    %v131 = vsel %vm130, %v108, %v120
    %vm132 = vcmask 523264
    %v133 = vsel %vm132, %v131, %v124
    %vm134 = vcmask 785408
    %v135 = vsel %vm134, %v133, %v128
    %136 = vst [vmem:[#allocation3] sm:$0x3] %v135
    // Predicated region
    $region14: #{tpu_custom_call.1} parent=1 // pred_check
      _
    $region15: #{tpu_custom_call.1} parent=1 // pred_check_branch
      %138 = sbr.rel (0) target = $region17
    $region16: #{tpu_custom_call.1} parent=1 // pred_region
      %s140 = ssub.s32 32, 32
      %141 = vsyncadd [#allocation4], %s140
      %s143 = sshll.u32 [#allocation3], 4
      %s144 = int_to_ptr.vmem [resolvable:$true] %s143
      %146 = dma.vmem_to_hbm [thread:$0]  %s144, 32, %s3, [#allocation4]
    $region17: #{tpu_custom_call.1} parent=1 // pred_fallthru
      _
    // Predicated region
    $region18: #{tpu_custom_call.1} parent=1 // pred_check
      _
    $region19: #{tpu_custom_call.1} parent=1 // pred_check_branch
      %148 = sbr.rel (0) target = $region21
    $region20: #{tpu_custom_call.1} parent=1 // pred_region
      %149 = dma.done [#allocation4], 32
    $region21: #{tpu_custom_call.1} parent=1 // pred_fallthru
      _
    %150 = vsyncpa [#allocation4], 1

</llo_original>
